<compile_context>
chip_gen: v5e
topology: v5e:2x2
jax: 0.10.0
libtpu: 0.0.40
codegen_flags: <defaults>
</compile_context>

<pallas_src>
import jax
import jax.numpy as jnp
from jax.experimental import pallas as pl
from jax.experimental.pallas import tpu as pltpu

HIDDEN = 256          # hidden width (all three hidden layers)
IN_PAD = 32           # padded input feature dim (>= BAY_S*BAY_T + 1 = 17)
OUT_PAD = 128         # lane-aligned padded output dim (>= BAY_S)
NEG_SLOPE = 0.01      # nn.LeakyReLU default
MAX_TB = 1024         # max batch-tile rows (few MiB of VMEM, amortizes step overhead)


def _round_up(x: int, m: int) -> int:
    return ((x + m - 1) // m) * m


def _cdiv(a: int, b: int) -> int:
    return -(-a // b)


def _leaky_relu(x):
    # max(x, 0.01*x) == LeakyReLU(x) since slope < 1; one fewer VALU op than where().
    return jnp.maximum(x, NEG_SLOPE * x)


def qnet_mlp_kernel(x_ref,
                    w1_ref, b1_ref,
                    w2_ref, b2_ref,
                    w3_ref, b3_ref,
                    w4_ref, b4_ref,
                    o_ref):
    """Fused 4-layer MLP on one batch tile: (Linear -> LeakyReLU) x3 -> Linear.

    x_ref:   [TB, IN_PAD]  bf16 (already cast in the wrapper)
    w*_ref:  bf16, stored [in, out]; b*_ref: [1, out] f32
    o_ref:   [TB, OUT_PAD] f32 (lane-dense store; real output sliced in wrapper)
    """
    # Hoist bias reads once per body (single VPU add per layer).
    b1 = b1_ref[...]
    b2 = b2_ref[...]
    b3 = b3_ref[...]
    b4 = b4_ref[...]

    x = x_ref[...]  # bf16 MXU operand

    h = jnp.dot(x, w1_ref[...], preferred_element_type=jnp.float32) + b1
    h = _leaky_relu(h).astype(jnp.bfloat16)

    h = jnp.dot(h, w2_ref[...], preferred_element_type=jnp.float32) + b2
    h = _leaky_relu(h).astype(jnp.bfloat16)

    h = jnp.dot(h, w3_ref[...], preferred_element_type=jnp.float32) + b3
    h = _leaky_relu(h).astype(jnp.bfloat16)

    out = jnp.dot(h, w4_ref[...], preferred_element_type=jnp.float32) + b4
    o_ref[...] = out  # f32, lane-dense [TB, OUT_PAD]


def _pick_tile(padded_batch: int) -> int:
    """Batch-tile rows: big tiles to amortize per-step overhead, but keep >=2
    grid steps for non-trivial batches so v7x's 2 TensorCores both get work."""
    if padded_batch <= 256:
        return padded_batch                     # tiny batch: one step
    tb = min(MAX_TB, padded_batch)
    if _cdiv(padded_batch, tb) < 2:
        tb = _round_up(_cdiv(padded_batch, 2), 16)
    return tb


def qnet_forward(s, params, bay_s):
    """Run the QNet forward pass.

    s: [batch, BAY_S*BAY_T + 1] (any float dtype; cast like s.float() -> bf16 operand)
    params: dict with padded bf16 weights w1..w4 ([in, out]) and f32 biases b1..b4 ([1, out])
    returns: [batch, BAY_S] float32
    """
    batch, in_dim = s.shape
    assert in_dim <= IN_PAD and bay_s <= OUT_PAD

    # Pad batch only to a multiple of 16 (bf16 sublane packing); ragged last
    # grid block is handled by Pallas masking, not by padding to the tile size.
    padded_batch = _round_up(batch, 16)
    tb = _pick_tile(padded_batch)
    grid = (_cdiv(padded_batch, tb),)

    # bf16 input, feature-padded 17 -> 32 with zeros (zero weight rows match).
    x = jnp.pad(s.astype(jnp.float32),
                ((0, padded_batch - batch), (0, IN_PAD - in_dim))
                ).astype(jnp.bfloat16)

    # Activation tiles walk the batch; weights/biases stay resident (index_map -> (0, 0)).
    x_spec = pl.BlockSpec((tb, IN_PAD), lambda i: (i, 0))
    out_spec = pl.BlockSpec((tb, OUT_PAD), lambda i: (i, 0))

    def wspec(shape):
        # Constant index_map -> block is revisited every step; Mosaic keeps it
        # VMEM-resident and elides the re-DMA.
        return pl.BlockSpec(shape, lambda i: (0, 0))

    # Advisory cost estimate so XLA schedules surrounding pad/slice sensibly.
    flops = 2 * padded_batch * (IN_PAD * HIDDEN + 2 * HIDDEN * HIDDEN + HIDDEN * OUT_PAD)
    weight_bytes = 2 * (IN_PAD * HIDDEN + 2 * HIDDEN * HIDDEN + HIDDEN * OUT_PAD) \
        + 4 * (3 * HIDDEN + OUT_PAD)
    bytes_accessed = padded_batch * IN_PAD * 2 + padded_batch * OUT_PAD * 4 + weight_bytes
    cost = pl.CostEstimate(flops=flops, transcendentals=0, bytes_accessed=bytes_accessed)

    out_padded = pl.pallas_call(
        qnet_mlp_kernel,
        out_shape=jax.ShapeDtypeStruct((padded_batch, OUT_PAD), jnp.float32),
        grid=grid,
        in_specs=[
            x_spec,
            wspec((IN_PAD, HIDDEN)), wspec((1, HIDDEN)),
            wspec((HIDDEN, HIDDEN)), wspec((1, HIDDEN)),
            wspec((HIDDEN, HIDDEN)), wspec((1, HIDDEN)),
            wspec((HIDDEN, OUT_PAD)), wspec((1, OUT_PAD)),
        ],
        out_specs=out_spec,
        compiler_params=pltpu.CompilerParams(
            dimension_semantics=("parallel",)),
        cost_estimate=cost,
    )(x,
      params["w1"], params["b1"],
      params["w2"], params["b2"],
      params["w3"], params["b3"],
      params["w4"], params["b4"])

    return out_padded[:batch, :bay_s]


def init_qnet_params(key, bay_s, bay_t, hidden=(HIDDEN, HIDDEN, HIDDEN)):
    """PyTorch-style nn.Linear init (uniform +/- 1/sqrt(fan_in)), then pad + cast.

    Weights stored as [in, out] (equivalent to PyTorch's x @ W.T + b), padded to
    aligned shapes with exact zeros so padded lanes contribute nothing,
    and cast to bf16 for the MXU. Biases stay f32.
    """
    input_dim = bay_s * bay_t + 1
    dims = [input_dim, *hidden, bay_s]
    pad_dims = [IN_PAD, *hidden, OUT_PAD]
    params = {}
    for i in range(4):
        fan_in, fan_out = dims[i], dims[i + 1]
        pin, pout = pad_dims[i], pad_dims[i + 1]
        key, kw, kb = jax.random.split(key, 3)
        bound = 1.0 / jnp.sqrt(float(fan_in))
        w = jax.random.uniform(kw, (fan_in, fan_out), jnp.float32, -bound, bound)
        b = jax.random.uniform(kb, (1, fan_out), jnp.float32, -bound, bound)
        w_pad = jnp.zeros((pin, pout), jnp.float32).at[:fan_in, :fan_out].set(w)
        b_pad = jnp.zeros((1, pout), jnp.float32).at[:, :fan_out].set(b)
        params[f"w{i + 1}"] = w_pad.astype(jnp.bfloat16)
        params[f"b{i + 1}"] = b_pad
    return params


def qnet_reference(s, params, bay_s):
    """Pure-JAX reference using the same bf16-operand / f32-accumulate scheme."""
    x = s.astype(jnp.float32)
    x = jnp.pad(x, ((0, 0), (0, IN_PAD - x.shape[1]))).astype(jnp.bfloat16)

    def layer(h, w, b, act):
        y = jnp.dot(h, w, preferred_element_type=jnp.float32) + b
        if act:
            y = jnp.maximum(y, NEG_SLOPE * y)
        return y

    h = layer(x, params["w1"], params["b1"], True).astype(jnp.bfloat16)
    h = layer(h, params["w2"], params["b2"], True).astype(jnp.bfloat16)
    h = layer(h, params["w3"], params["b3"], True).astype(jnp.bfloat16)
    out = layer(h, params["w4"], params["b4"], False)
    return out[:, :bay_s]


if __name__ == "__main__":
    # Small shapes consistent with the module: BAY_S=4, BAY_T=4 -> input_dim = 17
    BAY_S, BAY_T = 4, 4
    batch = 2

    key = jax.random.PRNGKey(0)
    key, k_in = jax.random.split(key)
    params = init_qnet_params(key, BAY_S, BAY_T)

    # State input s: [batch, BAY_S*BAY_T + 1]
    s = jax.random.normal(k_in, (batch, BAY_S * BAY_T + 1), dtype=jnp.float32)

    out = qnet_forward(s, params, BAY_S)
    out = jax.block_until_ready(out)

    ref = qnet_reference(s, params, BAY_S)
    assert out.shape == (batch, BAY_S), out.shape
    assert jnp.allclose(out, ref, atol=1e-2, rtol=1e-2), "mismatch vs reference"

    print("KERNEL_OK")
</pallas_src>

<mosaic_0001>
module attributes {stable_mosaic.version = 11 : i64} {
  func.func @qnet_mlp_kernel(%arg0: i32, %arg1: memref<16x32xbf16, #tpu.memory_space<vmem>>, %arg2: memref<32x256xbf16, #tpu.memory_space<vmem>>, %arg3: memref<1x256xf32, #tpu.memory_space<vmem>>, %arg4: memref<256x256xbf16, #tpu.memory_space<vmem>>, %arg5: memref<1x256xf32, #tpu.memory_space<vmem>>, %arg6: memref<256x256xbf16, #tpu.memory_space<vmem>>, %arg7: memref<1x256xf32, #tpu.memory_space<vmem>>, %arg8: memref<256x128xbf16, #tpu.memory_space<vmem>>, %arg9: memref<1x128xf32, #tpu.memory_space<vmem>>, %arg10: memref<16x128xf32, #tpu.memory_space<vmem>>) attributes {dimension_semantics = [#tpu.dimension_semantics<parallel>], iteration_bounds = array<i64: 1>, scalar_prefetch = 0 : i64, scratch_operands = 0 : i64, tpu.core_type = #tpu.core_type<tc>, window_params = [{transform_indices = @transform_0, window_bounds = array<i64: 16, 32>}, {pipeline_mode = #tpu.pipeline_mode<synchronous>, transform_indices = @transform_1, window_bounds = array<i64: 32, 256>}, {pipeline_mode = #tpu.pipeline_mode<synchronous>, transform_indices = @transform_2, window_bounds = array<i64: 1, 256>}, {pipeline_mode = #tpu.pipeline_mode<synchronous>, transform_indices = @transform_3, window_bounds = array<i64: 256, 256>}, {pipeline_mode = #tpu.pipeline_mode<synchronous>, transform_indices = @transform_4, window_bounds = array<i64: 1, 256>}, {pipeline_mode = #tpu.pipeline_mode<synchronous>, transform_indices = @transform_5, window_bounds = array<i64: 256, 256>}, {pipeline_mode = #tpu.pipeline_mode<synchronous>, transform_indices = @transform_6, window_bounds = array<i64: 1, 256>}, {pipeline_mode = #tpu.pipeline_mode<synchronous>, transform_indices = @transform_7, window_bounds = array<i64: 256, 128>}, {pipeline_mode = #tpu.pipeline_mode<synchronous>, transform_indices = @transform_8, window_bounds = array<i64: 1, 128>}, {transform_indices = @transform_9, window_bounds = array<i64: 16, 128>}]} {
    %c0 = arith.constant 0 : index
    %c0_0 = arith.constant 0 : index
    %0 = vector.load %arg3[%c0, %c0_0] : memref<1x256xf32, #tpu.memory_space<vmem>>, vector<1x256xf32>
    %c0_1 = arith.constant 0 : index
    %c0_2 = arith.constant 0 : index
    %1 = vector.load %arg5[%c0_1, %c0_2] : memref<1x256xf32, #tpu.memory_space<vmem>>, vector<1x256xf32>
    %c0_3 = arith.constant 0 : index
    %c0_4 = arith.constant 0 : index
    %2 = vector.load %arg7[%c0_3, %c0_4] : memref<1x256xf32, #tpu.memory_space<vmem>>, vector<1x256xf32>
    %c0_5 = arith.constant 0 : index
    %c0_6 = arith.constant 0 : index
    %3 = vector.load %arg9[%c0_5, %c0_6] : memref<1x128xf32, #tpu.memory_space<vmem>>, vector<1x128xf32>
    %c0_7 = arith.constant 0 : index
    %c0_8 = arith.constant 0 : index
    %4 = vector.load %arg1[%c0_7, %c0_8] : memref<16x32xbf16, #tpu.memory_space<vmem>>, vector<16x32xbf16>
    %c0_9 = arith.constant 0 : index
    %c0_10 = arith.constant 0 : index
    %5 = vector.load %arg2[%c0_9, %c0_10] : memref<32x256xbf16, #tpu.memory_space<vmem>>, vector<32x256xbf16>
    %cst = arith.constant dense<0.000000e+00> : vector<16x256xf32>
    %6 = tpu.matmul %4, %5, %cst {dimension_numbers = #tpu.dot_dimension_numbers<[1], [0], [0], [1], [0, 0, 1, 1], [], []>} : vector<16x32xbf16>, vector<32x256xbf16>, vector<16x256xf32> -> vector<16x256xf32>
    %7 = vector.broadcast %0 : vector<1x256xf32> to vector<16x256xf32>
    %8 = arith.addf %6, %7 : vector<16x256xf32>
    %cst_11 = arith.constant 0.00999999977 : f32
    %9 = vector.broadcast %cst_11 : f32 to vector<16x256xf32>
    %10 = arith.mulf %9, %8 : vector<16x256xf32>
    %11 = arith.maximumf %8, %10 : vector<16x256xf32>
    %12 = arith.truncf %11 : vector<16x256xf32> to vector<16x256xbf16>
    %c0_12 = arith.constant 0 : index
    %c0_13 = arith.constant 0 : index
    %13 = vector.load %arg4[%c0_12, %c0_13] : memref<256x256xbf16, #tpu.memory_space<vmem>>, vector<256x256xbf16>
    %cst_14 = arith.constant dense<0.000000e+00> : vector<16x256xf32>
    %14 = tpu.matmul %12, %13, %cst_14 {dimension_numbers = #tpu.dot_dimension_numbers<[1], [0], [0], [1], [0, 0, 1, 1], [], []>} : vector<16x256xbf16>, vector<256x256xbf16>, vector<16x256xf32> -> vector<16x256xf32>
    %15 = vector.broadcast %1 : vector<1x256xf32> to vector<16x256xf32>
    %16 = arith.addf %14, %15 : vector<16x256xf32>
    %cst_15 = arith.constant 0.00999999977 : f32
    %17 = vector.broadcast %cst_15 : f32 to vector<16x256xf32>
    %18 = arith.mulf %17, %16 : vector<16x256xf32>
    %19 = arith.maximumf %16, %18 : vector<16x256xf32>
    %20 = arith.truncf %19 : vector<16x256xf32> to vector<16x256xbf16>
    %c0_16 = arith.constant 0 : index
    %c0_17 = arith.constant 0 : index
    %21 = vector.load %arg6[%c0_16, %c0_17] : memref<256x256xbf16, #tpu.memory_space<vmem>>, vector<256x256xbf16>
    %cst_18 = arith.constant dense<0.000000e+00> : vector<16x256xf32>
    %22 = tpu.matmul %20, %21, %cst_18 {dimension_numbers = #tpu.dot_dimension_numbers<[1], [0], [0], [1], [0, 0, 1, 1], [], []>} : vector<16x256xbf16>, vector<256x256xbf16>, vector<16x256xf32> -> vector<16x256xf32>
    %23 = vector.broadcast %2 : vector<1x256xf32> to vector<16x256xf32>
    %24 = arith.addf %22, %23 : vector<16x256xf32>
    %cst_19 = arith.constant 0.00999999977 : f32
    %25 = vector.broadcast %cst_19 : f32 to vector<16x256xf32>
    %26 = arith.mulf %25, %24 : vector<16x256xf32>
    %27 = arith.maximumf %24, %26 : vector<16x256xf32>
    %28 = arith.truncf %27 : vector<16x256xf32> to vector<16x256xbf16>
    %c0_20 = arith.constant 0 : index
    %c0_21 = arith.constant 0 : index
    %29 = vector.load %arg8[%c0_20, %c0_21] : memref<256x128xbf16, #tpu.memory_space<vmem>>, vector<256x128xbf16>
    %cst_22 = arith.constant dense<0.000000e+00> : vector<16x128xf32>
    %30 = tpu.matmul %28, %29, %cst_22 {dimension_numbers = #tpu.dot_dimension_numbers<[1], [0], [0], [1], [0, 0, 1, 1], [], []>} : vector<16x256xbf16>, vector<256x128xbf16>, vector<16x128xf32> -> vector<16x128xf32>
    %31 = vector.broadcast %3 : vector<1x128xf32> to vector<16x128xf32>
    %32 = arith.addf %30, %31 : vector<16x128xf32>
    %c0_23 = arith.constant 0 : index
    %c0_24 = arith.constant 0 : index
    %33 = vector.load %arg10[%c0_23, %c0_24] : memref<16x128xf32, #tpu.memory_space<vmem>>, vector<16x128xf32>
    tpu.vector_store %arg10[%c0_23, %c0_24], %32 {strides = array<i32>} : memref<16x128xf32, #tpu.memory_space<vmem>>, vector<16x128xf32>,
    return
  }
  func.func @transform_0(%arg0: i32) -> (i32, i32) {
    %c0_i32 = arith.constant 0 : i32
    %c0_i32_0 = arith.constant 0 : i32
    return %arg0, %c0_i32 : i32, i32
  }
  func.func @transform_1(%arg0: i32) -> (i32, i32) {
    %c0_i32 = arith.constant 0 : i32
    %c0_i32_0 = arith.constant 0 : i32
    %c0_i32_1 = arith.constant 0 : i32
    return %c0_i32, %c0_i32_0 : i32, i32
  }
  func.func @transform_2(%arg0: i32) -> (i32, i32) {
    %c0_i32 = arith.constant 0 : i32
    %c0_i32_0 = arith.constant 0 : i32
    %c0_i32_1 = arith.constant 0 : i32
    return %c0_i32, %c0_i32_0 : i32, i32
  }
  func.func @transform_3(%arg0: i32) -> (i32, i32) {
    %c0_i32 = arith.constant 0 : i32
    %c0_i32_0 = arith.constant 0 : i32
    %c0_i32_1 = arith.constant 0 : i32
    return %c0_i32, %c0_i32_0 : i32, i32
  }
  func.func @transform_4(%arg0: i32) -> (i32, i32) {
    %c0_i32 = arith.constant 0 : i32
    %c0_i32_0 = arith.constant 0 : i32
    %c0_i32_1 = arith.constant 0 : i32
    return %c0_i32, %c0_i32_0 : i32, i32
  }
  func.func @transform_5(%arg0: i32) -> (i32, i32) {
    %c0_i32 = arith.constant 0 : i32
    %c0_i32_0 = arith.constant 0 : i32
    %c0_i32_1 = arith.constant 0 : i32
    return %c0_i32, %c0_i32_0 : i32, i32
  }
  func.func @transform_6(%arg0: i32) -> (i32, i32) {
    %c0_i32 = arith.constant 0 : i32
    %c0_i32_0 = arith.constant 0 : i32
    %c0_i32_1 = arith.constant 0 : i32
    return %c0_i32, %c0_i32_0 : i32, i32
  }
  func.func @transform_7(%arg0: i32) -> (i32, i32) {
    %c0_i32 = arith.constant 0 : i32
    %c0_i32_0 = arith.constant 0 : i32
    %c0_i32_1 = arith.constant 0 : i32
    return %c0_i32, %c0_i32_0 : i32, i32
  }
  func.func @transform_8(%arg0: i32) -> (i32, i32) {
    %c0_i32 = arith.constant 0 : i32
    %c0_i32_0 = arith.constant 0 : i32
    %c0_i32_1 = arith.constant 0 : i32
    return %c0_i32, %c0_i32_0 : i32, i32
  }
  func.func @transform_9(%arg0: i32) -> (i32, i32) {
    %c0_i32 = arith.constant 0 : i32
    %c0_i32_0 = arith.constant 0 : i32
    return %arg0, %c0_i32 : i32, i32
  }
}

</mosaic_0001>

<llo_original>
// kernel: tpu_custom_call.1
$region0: #{tpu_custom_call.1}
  #allocation0 [shape = 'u32[]', space=smem, size = 0x4, offset = 0x4, fixed_abs, tag = 'smem constant byte address 0x4 - core index']
  #allocation1 [shape = 'u32[72,128]{1,0:T(1,128)}', space=vmem, size = 0x9000, scoped, tag = 'internal scratch']
  %s0 = inlined_call_operand.hbm [shape: bf16[16,32], index: 0, kind: input, shape index: {}]
  %s1 = inlined_call_operand.hbm [shape: bf16[32,256], index: 1, kind: input, shape index: {}]
  %s2 = inlined_call_operand.hbm [shape: f32[1,256], index: 2, kind: input, shape index: {}]
  %s3 = inlined_call_operand.hbm [shape: bf16[256,256], index: 3, kind: input, shape index: {}]
  %s4 = inlined_call_operand.vmem [shape: f32[1,256], index: 4, kind: input, shape index: {}]
  %s5 = inlined_call_operand.hbm [shape: bf16[256,256], index: 5, kind: input, shape index: {}]
  %s6 = inlined_call_operand.vmem [shape: f32[1,256], index: 6, kind: input, shape index: {}]
  %s7 = inlined_call_operand.hbm [shape: bf16[256,128], index: 7, kind: input, shape index: {}]
  %s8 = inlined_call_operand.vmem [shape: f32[1,128], index: 8, kind: input, shape index: {}]
  %s9 = inlined_call_operand.hbm [shape: f32[16,128], index: 9, kind: output, shape index: {}]
  %s10 = sld [smem:[#allocation0]]
  $region70: #{tpu_custom_call.1} parent=0
    _
  %s12 = ssub.s32 1, %s10
  %s13 = scalar_select 0, %s12, %s10
  $region1: #{tpu_custom_call.1} parent=0
    #allocation2 [shape = 'u8[4096]{0}', space=vmem, size = 0x1000, scoped, tag = 'input window, operand 0, single buffered']
    #allocation3 [shape = 's32[1]{0}', space=sflag, size = 0x4, scoped, tag = 'scoped memory for tpu_custom_call.1']
    #allocation4 [shape = 's32[1]{0}', space=sflag, size = 0x4, scoped, tag = 'scoped memory for tpu_custom_call.1']
    #allocation5 [shape = 'u8[16384]{0}', space=vmem, size = 0x4000, scoped, tag = 'input window, operand 1, single buffered']
    #allocation6 [shape = 's32[1]{0}', space=sflag, size = 0x4, scoped, tag = 'scoped memory for tpu_custom_call.1']
    #allocation7 [shape = 'u8[1024]{0}', space=vmem, size = 0x400, scoped, tag = 'input window, operand 2, single buffered']
    #allocation8 [shape = 'u8[131072]{0}', space=vmem, size = 0x20000, scoped, tag = 'input window, operand 3, single buffered']
    #allocation9 [shape = 's32[1]{0}', space=sflag, size = 0x4, scoped, tag = 'scoped memory for tpu_custom_call.1']
    #allocation10 [shape = 'u8[131072]{0}', space=vmem, size = 0x20000, scoped, tag = 'input window, operand 5, single buffered']
    #allocation11 [shape = 'u8[65536]{0}', space=vmem, size = 0x10000, scoped, tag = 'input window, operand 7, single buffered']
    #allocation12 [shape = 's32[1]{0}', space=sflag, size = 0x4, scoped, tag = 'scoped memory for tpu_custom_call.1']
    #allocation13 [shape = 'u8[8192]{0}', space=vmem, size = 0x2000, scoped, tag = 'output window, operand 0, single buffered']
    %14 = vsyncpa [#allocation3], 0
    %15 = vsyncpa [#allocation6], 0
    %16 = vsyncpa [#allocation9], 0
    %17 = vsyncpa [#allocation12], 0
    %18 = vsyncpa [#allocation4], 0
    // Predicated region
    $region2: #{tpu_custom_call.1} parent=1 // pred_check
      _
    $region3: #{tpu_custom_call.1} parent=1 // pred_check_branch
      %20 = sbr.rel (0) target = $region5
    $region4: #{tpu_custom_call.1} parent=1 // pred_region
      %22 = vsyncadd [#allocation3], 0
      %s23 = sshll.u32 %s0, 4
      %s24 = int_to_ptr.hbm [resolvable:$true] %s23
      %s25 = sshll.u32 [#allocation2], 4
      %s26 = int_to_ptr.vmem [resolvable:$true] %s25
      %31 = dma.hbm_to_vmem [thread:$0]  %s24, 128, %s26, [#allocation3], 64, 64, 4
    $region5: #{tpu_custom_call.1} parent=1 // pred_fallthru
      _
    // Predicated region
    $region6: #{tpu_custom_call.1} parent=1 // pred_check
      _
    $region7: #{tpu_custom_call.1} parent=1 // pred_check_branch
      %33 = sbr.rel (0) target = $region9
    $region8: #{tpu_custom_call.1} parent=1 // pred_region
      %35 = vsyncadd [#allocation6], 0
      %s36 = sshll.u32 %s1, 4
      %s37 = int_to_ptr.hbm [resolvable:$true] %s36
      %s38 = sshll.u32 [#allocation5], 4
      %s39 = int_to_ptr.vmem [resolvable:$true] %s38
      %44 = dma.hbm_to_vmem [thread:$0]  %s37, 512, %s39, [#allocation6], 128, 128, 8
    $region9: #{tpu_custom_call.1} parent=1 // pred_fallthru
      _
    // Predicated region
    $region10: #{tpu_custom_call.1} parent=1 // pred_check
      _
    $region11: #{tpu_custom_call.1} parent=1 // pred_check_branch
      %46 = sbr.rel (0) target = $region13
    $region12: #{tpu_custom_call.1} parent=1 // pred_region
      %48 = vsyncadd [#allocation6], 0
      %s50 = sshll.u32 %s2, 4
      %s51 = int_to_ptr.hbm [resolvable:$true] %s50
      %s52 = sshll.u32 [#allocation7], 4
      %s53 = int_to_ptr.vmem [resolvable:$true] %s52
      %55 = dma.hbm_to_vmem [thread:$0]  %s51, 32, %s53, [#allocation6]
    $region13: #{tpu_custom_call.1} parent=1 // pred_fallthru
      _
    // Predicated region
    $region14: #{tpu_custom_call.1} parent=1 // pred_check
      _
    $region15: #{tpu_custom_call.1} parent=1 // pred_check_branch
      %57 = sbr.rel (0) target = $region17
    $region16: #{tpu_custom_call.1} parent=1 // pred_region
      %59 = vsyncadd [#allocation9], 0
      %s60 = sshll.u32 %s3, 4
      %s61 = int_to_ptr.hbm [resolvable:$true] %s60
      %s62 = sshll.u32 [#allocation8], 4
      %s63 = int_to_ptr.vmem [resolvable:$true] %s62
      %68 = dma.hbm_to_vmem [thread:$0]  %s61, 4096, %s63, [#allocation9], 128, 128, 8
    $region17: #{tpu_custom_call.1} parent=1 // pred_fallthru
      _
    // Predicated region
    $region18: #{tpu_custom_call.1} parent=1 // pred_check
      _
    $region19: #{tpu_custom_call.1} parent=1 // pred_check_branch
      %70 = sbr.rel (0) target = $region21
    $region20: #{tpu_custom_call.1} parent=1 // pred_region
      _
    $region21: #{tpu_custom_call.1} parent=1 // pred_fallthru
      _
    // Predicated region
    $region22: #{tpu_custom_call.1} parent=1 // pred_check
      _
    $region23: #{tpu_custom_call.1} parent=1 // pred_check_branch
      %72 = sbr.rel (0) target = $region25
    $region24: #{tpu_custom_call.1} parent=1 // pred_region
      %74 = vsyncadd [#allocation9], 0
      %s75 = sshll.u32 %s5, 4
      %s76 = int_to_ptr.hbm [resolvable:$true] %s75
      %s77 = sshll.u32 [#allocation10], 4
      %s78 = int_to_ptr.vmem [resolvable:$true] %s77
      %83 = dma.hbm_to_vmem [thread:$0]  %s76, 4096, %s78, [#allocation9], 128, 128, 8
    $region25: #{tpu_custom_call.1} parent=1 // pred_fallthru
      _
    // Predicated region
    $region26: #{tpu_custom_call.1} parent=1 // pred_check
      _
    $region27: #{tpu_custom_call.1} parent=1 // pred_check_branch
      %85 = sbr.rel (0) target = $region29
    $region28: #{tpu_custom_call.1} parent=1 // pred_region
      _
    $region29: #{tpu_custom_call.1} parent=1 // pred_fallthru
      _
    // Predicated region
    $region30: #{tpu_custom_call.1} parent=1 // pred_check
      _
    $region31: #{tpu_custom_call.1} parent=1 // pred_check_branch
      %87 = sbr.rel (0) target = $region33
    $region32: #{tpu_custom_call.1} parent=1 // pred_region
      %89 = vsyncadd [#allocation12], 0
      %s90 = sshll.u32 %s7, 4
      %s91 = int_to_ptr.hbm [resolvable:$true] %s90
      %s92 = sshll.u32 [#allocation11], 4
      %s93 = int_to_ptr.vmem [resolvable:$true] %s92
      %98 = dma.hbm_to_vmem [thread:$0]  %s91, 2048, %s93, [#allocation12], 64, 64, 4
    $region33: #{tpu_custom_call.1} parent=1 // pred_fallthru
      _
    // Predicated region
    $region34: #{tpu_custom_call.1} parent=1 // pred_check
      _
    $region35: #{tpu_custom_call.1} parent=1 // pred_check_branch
      %100 = sbr.rel (0) target = $region37
    $region36: #{tpu_custom_call.1} parent=1 // pred_region
      _
    $region37: #{tpu_custom_call.1} parent=1 // pred_fallthru
      _
    // Predicated region
    $region38: #{tpu_custom_call.1} parent=1 // pred_check
      _
    $region39: #{tpu_custom_call.1} parent=1 // pred_check_branch
      %102 = sbr.rel (0) target = $region41
    $region40: #{tpu_custom_call.1} parent=1 // pred_region
      %104 = dma.done [#allocation3], 128
    $region41: #{tpu_custom_call.1} parent=1 // pred_fallthru
      _
    // Predicated region
    $region42: #{tpu_custom_call.1} parent=1 // pred_check
      _
    $region43: #{tpu_custom_call.1} parent=1 // pred_check_branch
      %106 = sbr.rel (0) target = $region45
    $region44: #{tpu_custom_call.1} parent=1 // pred_region
      %108 = dma.done [#allocation6], 512
    $region45: #{tpu_custom_call.1} parent=1 // pred_fallthru
      _
    // Predicated region
    $region46: #{tpu_custom_call.1} parent=1 // pred_check
      _
    $region47: #{tpu_custom_call.1} parent=1 // pred_check_branch
      %110 = sbr.rel (0) target = $region49
    $region48: #{tpu_custom_call.1} parent=1 // pred_region
      %112 = dma.done [#allocation6], 32
    $region49: #{tpu_custom_call.1} parent=1 // pred_fallthru
      _
    // Predicated region
    $region50: #{tpu_custom_call.1} parent=1 // pred_check
      _
    $region51: #{tpu_custom_call.1} parent=1 // pred_check_branch
      %114 = sbr.rel (0) target = $region53
    $region52: #{tpu_custom_call.1} parent=1 // pred_region
      %116 = dma.done [#allocation9], 4096
    $region53: #{tpu_custom_call.1} parent=1 // pred_fallthru
      _
    // Predicated region
    $region54: #{tpu_custom_call.1} parent=1 // pred_check
      _
    $region55: #{tpu_custom_call.1} parent=1 // pred_check_branch
      %118 = sbr.rel (0) target = $region57
    $region56: #{tpu_custom_call.1} parent=1 // pred_region
      %120 = dma.done [#allocation9], 4096
    $region57: #{tpu_custom_call.1} parent=1 // pred_fallthru
      _
    // Predicated region
    $region58: #{tpu_custom_call.1} parent=1 // pred_check
      _
    $region59: #{tpu_custom_call.1} parent=1 // pred_check_branch
      %122 = sbr.rel (0) target = $region61
    $region60: #{tpu_custom_call.1} parent=1 // pred_region
      %124 = dma.done [#allocation12], 2048
    $region61: #{tpu_custom_call.1} parent=1 // pred_fallthru
      _
    %v126 = vld [vmem:[#allocation7] sm:$0x3]
    %v127 = vld [vmem:[%s4] sm:$0x3]
    %v128 = vld [vmem:[%s6] sm:$0x3]
    %v129 = vld [vmem:[%s8] sm:$0x1]
    %v130 = vld [vmem:[#allocation2] sm:$0xf]
    %v131 = vld [vmem:[#allocation2 + $0x4] sm:$0xf]
    %v132 = vld [vmem:[#allocation5] sm:$0xff]
    %v133 = vld [vmem:[#allocation5 + $0x8] sm:$0xff]
    %v134 = vld [vmem:[#allocation5 + $0x10] sm:$0xff]
    %v135 = vld [vmem:[#allocation5 + $0x18] sm:$0xff]
    %v137 = vperm.slane %v126, 0
    %v138 = vperm.slane %v126, 1
    %v143 = vunpack.c.l.b16 %v130
    %v144 = vunpack.c.l.b16 %v131
    %v145 = vpack.c.b16 %v144, %v143
    %v150 = vunpack.c.l.b16 %v132
    %v151 = vunpack.c.h.b16 %v132
    %v152 = vunpack.c.l.b16 %v133
    %v153 = vunpack.c.h.b16 %v133
    %v154 = vunpack.c.l.b16 %v134
    %v155 = vunpack.c.h.b16 %v134
    %v156 = vunpack.c.l.b16 %v135
    %v157 = vunpack.c.h.b16 %v135
    %v158 = vpack.c.b16 %v152, %v150
    %v159 = vpack.c.b16 %v153, %v151
    %v160 = vpack.c.b16 %v156, %v154
    %v161 = vpack.c.b16 %v157, %v155
    %vm166 = vcmask 261120
    %v168 = vsel %vm166, %v145, 0
    %170 = vmatpush.bf16.msra.mxu0 0
    %171 = vmatpush.bf16.msra.mxu0 0
    %172 = vmatpush.bf16.msra.mxu0 0
    %173 = vmatpush.bf16.msra.mxu0 0
    %174 = vmatpush.bf16.msra.mxu0 0
    %175 = vmatpush.bf16.msra.mxu0 0
    %176 = vmatpush.bf16.msra.mxu0 %v160
    %177 = vmatpush.bf16.msra.mxu0 %v158
    %178 = vmatmul.bf16.gmra.mxu0 %v168
    %v179 = vpop.f32.mrf.mxu0
    %v180 = vadd.f32 %v137, %v179
    %v181 = vpop.f32.mrf.mxu0
    %v182 = vadd.f32 %v137, %v181
    %183 = vdwg.mxu0
    %184 = vmatpush.bf16.msra.mxu0 0
    %185 = vmatpush.bf16.msra.mxu0 0
    %186 = vmatpush.bf16.msra.mxu0 0
    %187 = vmatpush.bf16.msra.mxu0 0
    %188 = vmatpush.bf16.msra.mxu0 0
    %189 = vmatpush.bf16.msra.mxu0 0
    %190 = vmatpush.bf16.msra.mxu0 %v161
    %191 = vmatpush.bf16.msra.mxu0 %v159
    %192 = vmatmul.bf16.gmra.mxu0 %v168
    %v193 = vpop.f32.mrf.mxu0
    %v194 = vadd.f32 %v138, %v193
    %v195 = vpop.f32.mrf.mxu0
    %v196 = vadd.f32 %v138, %v195
    %197 = vdwg.mxu0
    %v198 = vmul.f32 %v180, 0.01
    %v199 = vmul.f32 %v194, 0.01
    %v200 = vmul.f32 %v182, 0.01
    %v201 = vmul.f32 %v196, 0.01
    %v202 = vmax.f32 %v180, %v198
    %v203 = vmax.f32 %v194, %v199
    %v204 = vmax.f32 %v182, %v200
    %v205 = vmax.f32 %v196, %v201
    %v206 = vpack.c.bf16 %v204, %v202
    %v207 = vpack.c.bf16 %v205, %v203
    %v208 = vld [vmem:[#allocation8] sm:$0xff]
    %v209 = vld [vmem:[#allocation8 + $0x8] sm:$0xff]
    %v210 = vld [vmem:[#allocation8 + $0x10] sm:$0xff]
    %v211 = vld [vmem:[#allocation8 + $0x18] sm:$0xff]
    %v212 = vld [vmem:[#allocation8 + $0x20] sm:$0xff]
    %v213 = vld [vmem:[#allocation8 + $0x28] sm:$0xff]
    %v214 = vld [vmem:[#allocation8 + $0x30] sm:$0xff]
    %v215 = vld [vmem:[#allocation8 + $0x38] sm:$0xff]
    %v216 = vld [vmem:[#allocation8 + $0x40] sm:$0xff]
    %v217 = vld [vmem:[#allocation8 + $0x48] sm:$0xff]
    %v218 = vld [vmem:[#allocation8 + $0x50] sm:$0xff]
    %v219 = vld [vmem:[#allocation8 + $0x58] sm:$0xff]
    %v220 = vld [vmem:[#allocation8 + $0x60] sm:$0xff]
    %v221 = vld [vmem:[#allocation8 + $0x68] sm:$0xff]
    %v222 = vld [vmem:[#allocation8 + $0x70] sm:$0xff]
    %v223 = vld [vmem:[#allocation8 + $0x78] sm:$0xff]
    %v224 = vld [vmem:[#allocation8 + $0x80] sm:$0xff]
    %v225 = vld [vmem:[#allocation8 + $0x88] sm:$0xff]
    %v226 = vld [vmem:[#allocation8 + $0x90] sm:$0xff]
    %v227 = vld [vmem:[#allocation8 + $0x98] sm:$0xff]
    %v228 = vld [vmem:[#allocation8 + $0xa0] sm:$0xff]
    %v229 = vld [vmem:[#allocation8 + $0xa8] sm:$0xff]
    %v230 = vld [vmem:[#allocation8 + $0xb0] sm:$0xff]
    %v231 = vld [vmem:[#allocation8 + $0xb8] sm:$0xff]
    %v232 = vld [vmem:[#allocation8 + $0xc0] sm:$0xff]
    %v233 = vld [vmem:[#allocation8 + $0xc8] sm:$0xff]
    %v234 = vld [vmem:[#allocation8 + $0xd0] sm:$0xff]
    %v235 = vld [vmem:[#allocation8 + $0xd8] sm:$0xff]
    %v236 = vld [vmem:[#allocation8 + $0xe0] sm:$0xff]
    %v237 = vld [vmem:[#allocation8 + $0xe8] sm:$0xff]
    %v238 = vld [vmem:[#allocation8 + $0xf0] sm:$0xff]
    %v239 = vld [vmem:[#allocation8 + $0xf8] sm:$0xff]
    %v241 = vperm.slane %v127, 0
    %v242 = vperm.slane %v127, 1
    %v277 = vunpack.c.l.b16 %v208
    %v278 = vunpack.c.h.b16 %v208
    %v279 = vunpack.c.l.b16 %v209
    %v280 = vunpack.c.h.b16 %v209
    %v281 = vunpack.c.l.b16 %v210
    %v282 = vunpack.c.h.b16 %v210
    %v283 = vunpack.c.l.b16 %v211
    %v284 = vunpack.c.h.b16 %v211
    %v285 = vunpack.c.l.b16 %v212
    %v286 = vunpack.c.h.b16 %v212
    %v287 = vunpack.c.l.b16 %v213
    %v288 = vunpack.c.h.b16 %v213
    %v289 = vunpack.c.l.b16 %v214
    %v290 = vunpack.c.h.b16 %v214
    %v291 = vunpack.c.l.b16 %v215
    %v292 = vunpack.c.h.b16 %v215
    %v293 = vunpack.c.l.b16 %v216
    %v294 = vunpack.c.h.b16 %v216
    %v295 = vunpack.c.l.b16 %v217
    %v296 = vunpack.c.h.b16 %v217
    %v297 = vunpack.c.l.b16 %v218
    %v298 = vunpack.c.h.b16 %v218
    %v299 = vunpack.c.l.b16 %v219
    %v300 = vunpack.c.h.b16 %v219
    %v301 = vunpack.c.l.b16 %v220
    %v302 = vunpack.c.h.b16 %v220
    %v303 = vunpack.c.l.b16 %v221
    %v304 = vunpack.c.h.b16 %v221
    %v305 = vunpack.c.l.b16 %v222
    %v306 = vunpack.c.h.b16 %v222
    %v307 = vunpack.c.l.b16 %v223
    %v308 = vunpack.c.h.b16 %v223
    %v309 = vunpack.c.l.b16 %v224
    %v310 = vunpack.c.h.b16 %v224
    %v311 = vunpack.c.l.b16 %v225
    %v312 = vunpack.c.h.b16 %v225
    %v313 = vunpack.c.l.b16 %v226
    %v314 = vunpack.c.h.b16 %v226
    %v315 = vunpack.c.l.b16 %v227
    %v316 = vunpack.c.h.b16 %v227
    %v317 = vunpack.c.l.b16 %v228
    %v318 = vunpack.c.h.b16 %v228
    %v319 = vunpack.c.l.b16 %v229
    %v320 = vunpack.c.h.b16 %v229
    %v321 = vunpack.c.l.b16 %v230
    %v322 = vunpack.c.h.b16 %v230
    %v323 = vunpack.c.l.b16 %v231
    %v324 = vunpack.c.h.b16 %v231
    %v325 = vunpack.c.l.b16 %v232
    %v326 = vunpack.c.h.b16 %v232
    %v327 = vunpack.c.l.b16 %v233
    %v328 = vunpack.c.h.b16 %v233
    %v329 = vunpack.c.l.b16 %v234
    %v330 = vunpack.c.h.b16 %v234
    %v331 = vunpack.c.l.b16 %v235
    %v332 = vunpack.c.h.b16 %v235
    %v333 = vunpack.c.l.b16 %v236
    %v334 = vunpack.c.h.b16 %v236
    %v335 = vunpack.c.l.b16 %v237
    %v336 = vunpack.c.h.b16 %v237
    %v337 = vunpack.c.l.b16 %v238
    %v338 = vunpack.c.h.b16 %v238
    %v339 = vunpack.c.l.b16 %v239
    %v340 = vunpack.c.h.b16 %v239
    %v341 = vpack.c.b16 %v279, %v277
    %v342 = vpack.c.b16 %v280, %v278
    %v343 = vpack.c.b16 %v283, %v281
    %v344 = vpack.c.b16 %v284, %v282
    %v345 = vpack.c.b16 %v287, %v285
    %v346 = vpack.c.b16 %v288, %v286
    %v347 = vpack.c.b16 %v291, %v289
    %v348 = vpack.c.b16 %v292, %v290
    %v349 = vpack.c.b16 %v295, %v293
    %v350 = vpack.c.b16 %v296, %v294
    %v351 = vpack.c.b16 %v299, %v297
    %v352 = vpack.c.b16 %v300, %v298
    %v353 = vpack.c.b16 %v303, %v301
    %v354 = vpack.c.b16 %v304, %v302
    %v355 = vpack.c.b16 %v307, %v305
    %v356 = vpack.c.b16 %v308, %v306
    %v357 = vpack.c.b16 %v311, %v309
    %v358 = vpack.c.b16 %v312, %v310
    %v359 = vpack.c.b16 %v315, %v313
    %v360 = vpack.c.b16 %v316, %v314
    %v361 = vpack.c.b16 %v319, %v317
    %v362 = vpack.c.b16 %v320, %v318
    %v363 = vpack.c.b16 %v323, %v321
    %v364 = vpack.c.b16 %v324, %v322
    %v365 = vpack.c.b16 %v327, %v325
    %v366 = vpack.c.b16 %v328, %v326
    %v367 = vpack.c.b16 %v331, %v329
    %v368 = vpack.c.b16 %v332, %v330
    %v369 = vpack.c.b16 %v335, %v333
    %v370 = vpack.c.b16 %v336, %v334
    %v371 = vpack.c.b16 %v339, %v337
    %v372 = vpack.c.b16 %v340, %v338
    %405 = vmatpush.bf16.msra.mxu0 %v355
    %406 = vmatpush.bf16.msra.mxu0 %v353
    %407 = vmatpush.bf16.msra.mxu0 %v351
    %408 = vmatpush.bf16.msra.mxu0 %v349
    %409 = vmatpush.bf16.msra.mxu0 %v347
    %410 = vmatpush.bf16.msra.mxu0 %v345
    %411 = vmatpush.bf16.msra.mxu0 %v343
    %412 = vmatpush.bf16.msra.mxu0 %v341
    %413 = vmatmul.bf16.gmra.mxu0 %v206
    %v414 = vpop.f32.mrf.mxu0
    %v415 = vadd.f32 %v241, %v414
    %v416 = vpop.f32.mrf.mxu0
    %v417 = vadd.f32 %v241, %v416
    %418 = vdwg.mxu0
    %419 = vmatpush.bf16.msra.mxu0 %v371
    %420 = vmatpush.bf16.msra.mxu0 %v369
    %421 = vmatpush.bf16.msra.mxu0 %v367
    %422 = vmatpush.bf16.msra.mxu0 %v365
    %423 = vmatpush.bf16.msra.mxu0 %v363
    %424 = vmatpush.bf16.msra.mxu0 %v361
    %425 = vmatpush.bf16.msra.mxu0 %v359
    %426 = vmatpush.bf16.msra.mxu0 %v357
    %427 = vmatmul.bf16.gmra.mxu0 %v207
    %v428 = vpop.f32.mrf.mxu0
    %v429 = vadd.f32 %v415, %v428
    %v430 = vpop.f32.mrf.mxu0
    %v431 = vadd.f32 %v417, %v430
    %432 = vdwg.mxu0
    %433 = vmatpush.bf16.msra.mxu0 %v356
    %434 = vmatpush.bf16.msra.mxu0 %v354
    %435 = vmatpush.bf16.msra.mxu0 %v352
    %436 = vmatpush.bf16.msra.mxu0 %v350
    %437 = vmatpush.bf16.msra.mxu0 %v348
    %438 = vmatpush.bf16.msra.mxu0 %v346
    %439 = vmatpush.bf16.msra.mxu0 %v344
    %440 = vmatpush.bf16.msra.mxu0 %v342
    %441 = vmatmul.bf16.gmra.mxu0 %v206
    %v442 = vpop.f32.mrf.mxu0
    %v443 = vadd.f32 %v242, %v442
    %v444 = vpop.f32.mrf.mxu0
    %v445 = vadd.f32 %v242, %v444
    %446 = vdwg.mxu0
    %447 = vmatpush.bf16.msra.mxu0 %v372
    %448 = vmatpush.bf16.msra.mxu0 %v370
    %449 = vmatpush.bf16.msra.mxu0 %v368
    %450 = vmatpush.bf16.msra.mxu0 %v366
    %451 = vmatpush.bf16.msra.mxu0 %v364
    %452 = vmatpush.bf16.msra.mxu0 %v362
    %453 = vmatpush.bf16.msra.mxu0 %v360
    %454 = vmatpush.bf16.msra.mxu0 %v358
    %455 = vmatmul.bf16.gmra.mxu0 %v207
    %v456 = vpop.f32.mrf.mxu0
    %v457 = vadd.f32 %v443, %v456
    %v458 = vpop.f32.mrf.mxu0
    %v459 = vadd.f32 %v445, %v458
    %460 = vdwg.mxu0
    %v461 = vmul.f32 %v429, 0.01
    %v462 = vmul.f32 %v457, 0.01
    %v463 = vmul.f32 %v431, 0.01
    %v464 = vmul.f32 %v459, 0.01
    %v465 = vmax.f32 %v429, %v461
    %v466 = vmax.f32 %v457, %v462
    %v467 = vmax.f32 %v431, %v463
    %v468 = vmax.f32 %v459, %v464
    %v469 = vpack.c.bf16 %v467, %v465
    %v470 = vpack.c.bf16 %v468, %v466
    %v471 = vld [vmem:[#allocation10] sm:$0xff]
    %v472 = vld [vmem:[#allocation10 + $0x8] sm:$0xff]
    %v473 = vld [vmem:[#allocation10 + $0x10] sm:$0xff]
    %v474 = vld [vmem:[#allocation10 + $0x18] sm:$0xff]
    %v475 = vld [vmem:[#allocation10 + $0x20] sm:$0xff]
    %v476 = vld [vmem:[#allocation10 + $0x28] sm:$0xff]
    %v477 = vld [vmem:[#allocation10 + $0x30] sm:$0xff]
    %v478 = vld [vmem:[#allocation10 + $0x38] sm:$0xff]
    %v479 = vld [vmem:[#allocation10 + $0x40] sm:$0xff]
    %v480 = vld [vmem:[#allocation10 + $0x48] sm:$0xff]
    %v481 = vld [vmem:[#allocation10 + $0x50] sm:$0xff]
    %v482 = vld [vmem:[#allocation10 + $0x58] sm:$0xff]
    %v483 = vld [vmem:[#allocation10 + $0x60] sm:$0xff]
    %v484 = vld [vmem:[#allocation10 + $0x68] sm:$0xff]
    %v485 = vld [vmem:[#allocation10 + $0x70] sm:$0xff]
    %v486 = vld [vmem:[#allocation10 + $0x78] sm:$0xff]
    %v487 = vld [vmem:[#allocation10 + $0x80] sm:$0xff]
    %v488 = vld [vmem:[#allocation10 + $0x88] sm:$0xff]
    %v489 = vld [vmem:[#allocation10 + $0x90] sm:$0xff]
    %v490 = vld [vmem:[#allocation10 + $0x98] sm:$0xff]
    %v491 = vld [vmem:[#allocation10 + $0xa0] sm:$0xff]
    %v492 = vld [vmem:[#allocation10 + $0xa8] sm:$0xff]
    %v493 = vld [vmem:[#allocation10 + $0xb0] sm:$0xff]
    %v494 = vld [vmem:[#allocation10 + $0xb8] sm:$0xff]
    %v495 = vld [vmem:[#allocation10 + $0xc0] sm:$0xff]
    %v496 = vld [vmem:[#allocation10 + $0xc8] sm:$0xff]
    %v497 = vld [vmem:[#allocation10 + $0xd0] sm:$0xff]
    %v498 = vld [vmem:[#allocation10 + $0xd8] sm:$0xff]
    %v499 = vld [vmem:[#allocation10 + $0xe0] sm:$0xff]
    %v500 = vld [vmem:[#allocation10 + $0xe8] sm:$0xff]
    %v501 = vld [vmem:[#allocation10 + $0xf0] sm:$0xff]
    %v502 = vld [vmem:[#allocation10 + $0xf8] sm:$0xff]
    %v504 = vperm.slane %v128, 0
    %v505 = vperm.slane %v128, 1
    %v540 = vunpack.c.l.b16 %v471
    %v541 = vunpack.c.h.b16 %v471
    %v542 = vunpack.c.l.b16 %v472
    %v543 = vunpack.c.h.b16 %v472
    %v544 = vunpack.c.l.b16 %v473
    %v545 = vunpack.c.h.b16 %v473
    %v546 = vunpack.c.l.b16 %v474
    %v547 = vunpack.c.h.b16 %v474
    %v548 = vunpack.c.l.b16 %v475
    %v549 = vunpack.c.h.b16 %v475
    %v550 = vunpack.c.l.b16 %v476
    %v551 = vunpack.c.h.b16 %v476
    %v552 = vunpack.c.l.b16 %v477
    %v553 = vunpack.c.h.b16 %v477
    %v554 = vunpack.c.l.b16 %v478
    %v555 = vunpack.c.h.b16 %v478
    %v556 = vunpack.c.l.b16 %v479
    %v557 = vunpack.c.h.b16 %v479
    %v558 = vunpack.c.l.b16 %v480
    %v559 = vunpack.c.h.b16 %v480
    %v560 = vunpack.c.l.b16 %v481
    %v561 = vunpack.c.h.b16 %v481
    %v562 = vunpack.c.l.b16 %v482
    %v563 = vunpack.c.h.b16 %v482
    %v564 = vunpack.c.l.b16 %v483
    %v565 = vunpack.c.h.b16 %v483
    %v566 = vunpack.c.l.b16 %v484
    %v567 = vunpack.c.h.b16 %v484
    %v568 = vunpack.c.l.b16 %v485
    %v569 = vunpack.c.h.b16 %v485
    %v570 = vunpack.c.l.b16 %v486
    %v571 = vunpack.c.h.b16 %v486
    %v572 = vunpack.c.l.b16 %v487
    %v573 = vunpack.c.h.b16 %v487
    %v574 = vunpack.c.l.b16 %v488
    %v575 = vunpack.c.h.b16 %v488
    %v576 = vunpack.c.l.b16 %v489
    %v577 = vunpack.c.h.b16 %v489
    %v578 = vunpack.c.l.b16 %v490
    %v579 = vunpack.c.h.b16 %v490
    %v580 = vunpack.c.l.b16 %v491
    %v581 = vunpack.c.h.b16 %v491
    %v582 = vunpack.c.l.b16 %v492
    %v583 = vunpack.c.h.b16 %v492
    %v584 = vunpack.c.l.b16 %v493
    %v585 = vunpack.c.h.b16 %v493
    %v586 = vunpack.c.l.b16 %v494
    %v587 = vunpack.c.h.b16 %v494
    %v588 = vunpack.c.l.b16 %v495
    %v589 = vunpack.c.h.b16 %v495
    %v590 = vunpack.c.l.b16 %v496
    %v591 = vunpack.c.h.b16 %v496
    %v592 = vunpack.c.l.b16 %v497
    %v593 = vunpack.c.h.b16 %v497
    %v594 = vunpack.c.l.b16 %v498
    %v595 = vunpack.c.h.b16 %v498
    %v596 = vunpack.c.l.b16 %v499
    %v597 = vunpack.c.h.b16 %v499
    %v598 = vunpack.c.l.b16 %v500
    %v599 = vunpack.c.h.b16 %v500
    %v600 = vunpack.c.l.b16 %v501
    %v601 = vunpack.c.h.b16 %v501
    %v602 = vunpack.c.l.b16 %v502
    %v603 = vunpack.c.h.b16 %v502
    %v604 = vpack.c.b16 %v542, %v540
    %v605 = vpack.c.b16 %v543, %v541
    %v606 = vpack.c.b16 %v546, %v544
    %v607 = vpack.c.b16 %v547, %v545
    %v608 = vpack.c.b16 %v550, %v548
    %v609 = vpack.c.b16 %v551, %v549
    %v610 = vpack.c.b16 %v554, %v552
    %v611 = vpack.c.b16 %v555, %v553
    %v612 = vpack.c.b16 %v558, %v556
    %v613 = vpack.c.b16 %v559, %v557
    %v614 = vpack.c.b16 %v562, %v560
    %v615 = vpack.c.b16 %v563, %v561
    %v616 = vpack.c.b16 %v566, %v564
    %v617 = vpack.c.b16 %v567, %v565
    %v618 = vpack.c.b16 %v570, %v568
    %v619 = vpack.c.b16 %v571, %v569
    %v620 = vpack.c.b16 %v574, %v572
    %v621 = vpack.c.b16 %v575, %v573
    %v622 = vpack.c.b16 %v578, %v576
    %v623 = vpack.c.b16 %v579, %v577
    %v624 = vpack.c.b16 %v582, %v580
    %v625 = vpack.c.b16 %v583, %v581
    %v626 = vpack.c.b16 %v586, %v584
    %v627 = vpack.c.b16 %v587, %v585
    %v628 = vpack.c.b16 %v590, %v588
    %v629 = vpack.c.b16 %v591, %v589
    %v630 = vpack.c.b16 %v594, %v592
    %v631 = vpack.c.b16 %v595, %v593
    %v632 = vpack.c.b16 %v598, %v596
    %v633 = vpack.c.b16 %v599, %v597
    %v634 = vpack.c.b16 %v602, %v600
    %v635 = vpack.c.b16 %v603, %v601
    %668 = vmatpush.bf16.msra.mxu0 %v618
    %669 = vmatpush.bf16.msra.mxu0 %v616
    %670 = vmatpush.bf16.msra.mxu0 %v614
    %671 = vmatpush.bf16.msra.mxu0 %v612
    %672 = vmatpush.bf16.msra.mxu0 %v610
    %673 = vmatpush.bf16.msra.mxu0 %v608
    %674 = vmatpush.bf16.msra.mxu0 %v606
    %675 = vmatpush.bf16.msra.mxu0 %v604
    %676 = vmatmul.bf16.gmra.mxu0 %v469
    %v677 = vpop.f32.mrf.mxu0
    %v678 = vadd.f32 %v504, %v677
    %v679 = vpop.f32.mrf.mxu0
    %v680 = vadd.f32 %v504, %v679
    %681 = vdwg.mxu0
    %682 = vmatpush.bf16.msra.mxu0 %v634
    %683 = vmatpush.bf16.msra.mxu0 %v632
    %684 = vmatpush.bf16.msra.mxu0 %v630
    %685 = vmatpush.bf16.msra.mxu0 %v628
    %686 = vmatpush.bf16.msra.mxu0 %v626
    %687 = vmatpush.bf16.msra.mxu0 %v624
    %688 = vmatpush.bf16.msra.mxu0 %v622
    %689 = vmatpush.bf16.msra.mxu0 %v620
    %690 = vmatmul.bf16.gmra.mxu0 %v470
    %v691 = vpop.f32.mrf.mxu0
    %v692 = vadd.f32 %v678, %v691
    %v693 = vpop.f32.mrf.mxu0
    %v694 = vadd.f32 %v680, %v693
    %695 = vdwg.mxu0
    %696 = vmatpush.bf16.msra.mxu0 %v619
    %697 = vmatpush.bf16.msra.mxu0 %v617
    %698 = vmatpush.bf16.msra.mxu0 %v615
    %699 = vmatpush.bf16.msra.mxu0 %v613
    %700 = vmatpush.bf16.msra.mxu0 %v611
    %701 = vmatpush.bf16.msra.mxu0 %v609
    %702 = vmatpush.bf16.msra.mxu0 %v607
    %703 = vmatpush.bf16.msra.mxu0 %v605
    %704 = vmatmul.bf16.gmra.mxu0 %v469
    %v705 = vpop.f32.mrf.mxu0
    %v706 = vadd.f32 %v505, %v705
    %v707 = vpop.f32.mrf.mxu0
    %v708 = vadd.f32 %v505, %v707
    %709 = vdwg.mxu0
    %710 = vmatpush.bf16.msra.mxu0 %v635
    %711 = vmatpush.bf16.msra.mxu0 %v633
    %712 = vmatpush.bf16.msra.mxu0 %v631
    %713 = vmatpush.bf16.msra.mxu0 %v629
    %714 = vmatpush.bf16.msra.mxu0 %v627
    %715 = vmatpush.bf16.msra.mxu0 %v625
    %716 = vmatpush.bf16.msra.mxu0 %v623
    %717 = vmatpush.bf16.msra.mxu0 %v621
    %718 = vmatmul.bf16.gmra.mxu0 %v470
    %v719 = vpop.f32.mrf.mxu0
    %v720 = vadd.f32 %v706, %v719
    %v721 = vpop.f32.mrf.mxu0
    %v722 = vadd.f32 %v708, %v721
    %723 = vdwg.mxu0
    %v724 = vmul.f32 %v692, 0.01
    %v725 = vmul.f32 %v720, 0.01
    %v726 = vmul.f32 %v694, 0.01
    %v727 = vmul.f32 %v722, 0.01
    %v728 = vmax.f32 %v692, %v724
    %v729 = vmax.f32 %v720, %v725
    %v730 = vmax.f32 %v694, %v726
    %v731 = vmax.f32 %v722, %v727
    %v732 = vpack.c.bf16 %v730, %v728
    %v733 = vpack.c.bf16 %v731, %v729
    %v734 = vld [vmem:[#allocation11] sm:$0xf]
    %v735 = vld [vmem:[#allocation11 + $0x4] sm:$0xf]
    %v736 = vld [vmem:[#allocation11 + $0x8] sm:$0xf]
    %v737 = vld [vmem:[#allocation11 + $0xc] sm:$0xf]
    %v738 = vld [vmem:[#allocation11 + $0x10] sm:$0xf]
    %v739 = vld [vmem:[#allocation11 + $0x14] sm:$0xf]
    %v740 = vld [vmem:[#allocation11 + $0x18] sm:$0xf]
    %v741 = vld [vmem:[#allocation11 + $0x1c] sm:$0xf]
    %v742 = vld [vmem:[#allocation11 + $0x20] sm:$0xf]
    %v743 = vld [vmem:[#allocation11 + $0x24] sm:$0xf]
    %v744 = vld [vmem:[#allocation11 + $0x28] sm:$0xf]
    %v745 = vld [vmem:[#allocation11 + $0x2c] sm:$0xf]
    %v746 = vld [vmem:[#allocation11 + $0x30] sm:$0xf]
    %v747 = vld [vmem:[#allocation11 + $0x34] sm:$0xf]
    %v748 = vld [vmem:[#allocation11 + $0x38] sm:$0xf]
    %v749 = vld [vmem:[#allocation11 + $0x3c] sm:$0xf]
    %v750 = vld [vmem:[#allocation11 + $0x40] sm:$0xf]
    %v751 = vld [vmem:[#allocation11 + $0x44] sm:$0xf]
    %v752 = vld [vmem:[#allocation11 + $0x48] sm:$0xf]
    %v753 = vld [vmem:[#allocation11 + $0x4c] sm:$0xf]
    %v754 = vld [vmem:[#allocation11 + $0x50] sm:$0xf]
    %v755 = vld [vmem:[#allocation11 + $0x54] sm:$0xf]
    %v756 = vld [vmem:[#allocation11 + $0x58] sm:$0xf]
    %v757 = vld [vmem:[#allocation11 + $0x5c] sm:$0xf]
    %v758 = vld [vmem:[#allocation11 + $0x60] sm:$0xf]
    %v759 = vld [vmem:[#allocation11 + $0x64] sm:$0xf]
    %v760 = vld [vmem:[#allocation11 + $0x68] sm:$0xf]
    %v761 = vld [vmem:[#allocation11 + $0x6c] sm:$0xf]
    %v762 = vld [vmem:[#allocation11 + $0x70] sm:$0xf]
    %v763 = vld [vmem:[#allocation11 + $0x74] sm:$0xf]
    %v764 = vld [vmem:[#allocation11 + $0x78] sm:$0xf]
    %v765 = vld [vmem:[#allocation11 + $0x7c] sm:$0xf]
    %v767 = vperm.slane %v129, 0
    %v801 = vunpack.c.l.b16 %v734
    %v802 = vunpack.c.l.b16 %v735
    %v803 = vunpack.c.l.b16 %v736
    %v804 = vunpack.c.l.b16 %v737
    %v805 = vunpack.c.l.b16 %v738
    %v806 = vunpack.c.l.b16 %v739
    %v807 = vunpack.c.l.b16 %v740
    %v808 = vunpack.c.l.b16 %v741
    %v809 = vunpack.c.l.b16 %v742
    %v810 = vunpack.c.l.b16 %v743
    %v811 = vunpack.c.l.b16 %v744
    %v812 = vunpack.c.l.b16 %v745
    %v813 = vunpack.c.l.b16 %v746
    %v814 = vunpack.c.l.b16 %v747
    %v815 = vunpack.c.l.b16 %v748
    %v816 = vunpack.c.l.b16 %v749
    %v817 = vunpack.c.l.b16 %v750
    %v818 = vunpack.c.l.b16 %v751
    %v819 = vunpack.c.l.b16 %v752
    %v820 = vunpack.c.l.b16 %v753
    %v821 = vunpack.c.l.b16 %v754
    %v822 = vunpack.c.l.b16 %v755
    %v823 = vunpack.c.l.b16 %v756
    %v824 = vunpack.c.l.b16 %v757
    %v825 = vunpack.c.l.b16 %v758
    %v826 = vunpack.c.l.b16 %v759
    %v827 = vunpack.c.l.b16 %v760
    %v828 = vunpack.c.l.b16 %v761
    %v829 = vunpack.c.l.b16 %v762
    %v830 = vunpack.c.l.b16 %v763
    %v831 = vunpack.c.l.b16 %v764
    %v832 = vunpack.c.l.b16 %v765
    %v833 = vpack.c.b16 %v802, %v801
    %v834 = vpack.c.b16 %v804, %v803
    %v835 = vpack.c.b16 %v806, %v805
    %v836 = vpack.c.b16 %v808, %v807
    %v837 = vpack.c.b16 %v810, %v809
    %v838 = vpack.c.b16 %v812, %v811
    %v839 = vpack.c.b16 %v814, %v813
    %v840 = vpack.c.b16 %v816, %v815
    %v841 = vpack.c.b16 %v818, %v817
    %v842 = vpack.c.b16 %v820, %v819
    %v843 = vpack.c.b16 %v822, %v821
    %v844 = vpack.c.b16 %v824, %v823
    %v845 = vpack.c.b16 %v826, %v825
    %v846 = vpack.c.b16 %v828, %v827
    %v847 = vpack.c.b16 %v830, %v829
    %v848 = vpack.c.b16 %v832, %v831
    %865 = vmatpush.bf16.msra.mxu0 %v840
    %866 = vmatpush.bf16.msra.mxu0 %v839
    %867 = vmatpush.bf16.msra.mxu0 %v838
    %868 = vmatpush.bf16.msra.mxu0 %v837
    %869 = vmatpush.bf16.msra.mxu0 %v836
    %870 = vmatpush.bf16.msra.mxu0 %v835
    %871 = vmatpush.bf16.msra.mxu0 %v834
    %872 = vmatpush.bf16.msra.mxu0 %v833
    %873 = vmatmul.bf16.gmra.mxu0 %v732
    %v874 = vpop.f32.mrf.mxu0
    %v875 = vadd.f32 %v767, %v874
    %v876 = vpop.f32.mrf.mxu0
    %v877 = vadd.f32 %v767, %v876
    %878 = vdwg.mxu0
    %879 = vmatpush.bf16.msra.mxu0 %v848
    %880 = vmatpush.bf16.msra.mxu0 %v847
    %881 = vmatpush.bf16.msra.mxu0 %v846
    %882 = vmatpush.bf16.msra.mxu0 %v845
    %883 = vmatpush.bf16.msra.mxu0 %v844
    %884 = vmatpush.bf16.msra.mxu0 %v843
    %885 = vmatpush.bf16.msra.mxu0 %v842
    %886 = vmatpush.bf16.msra.mxu0 %v841
    %887 = vmatmul.bf16.gmra.mxu0 %v733
    %v888 = vpop.f32.mrf.mxu0
    %v889 = vadd.f32 %v875, %v888
    %v890 = vpop.f32.mrf.mxu0
    %v891 = vadd.f32 %v877, %v890
    %892 = vdwg.mxu0
    %893 = vst [vmem:[#allocation13] sm:$0xff] %v889
    %894 = vst [vmem:[#allocation13 + $0x8] sm:$0xff] %v891
    // Predicated region
    $region62: #{tpu_custom_call.1} parent=1 // pred_check
      _
    $region63: #{tpu_custom_call.1} parent=1 // pred_check_branch
      %896 = sbr.rel (0) target = $region65
    $region64: #{tpu_custom_call.1} parent=1 // pred_region
      %898 = vsyncadd [#allocation4], 0
      %s899 = sshll.u32 [#allocation13], 4
      %s900 = int_to_ptr.vmem [resolvable:$true] %s899
      %s901 = sshll.u32 %s9, 4
      %s902 = int_to_ptr.hbm [resolvable:$true] %s901
      %907 = dma.vmem_to_hbm [thread:$0]  %s900, 256, %s902, [#allocation4], 128, 128, 8
    $region65: #{tpu_custom_call.1} parent=1 // pred_fallthru
      _
    // Predicated region
    $region66: #{tpu_custom_call.1} parent=1 // pred_check
      _
    $region67: #{tpu_custom_call.1} parent=1 // pred_check_branch
      %909 = sbr.rel (0) target = $region69
    $region68: #{tpu_custom_call.1} parent=1 // pred_region
      %911 = dma.done [#allocation4], 256
    $region69: #{tpu_custom_call.1} parent=1 // pred_fallthru
      _
    %912 = vsyncpa [#allocation3], 1
    %913 = vsyncpa [#allocation6], 1
    %914 = vsyncpa [#allocation9], 1
    %915 = vsyncpa [#allocation12], 1
    %916 = vsyncpa [#allocation4], 1

</llo_original>
